<compile_context>
chip_gen: v7x
topology: tpu7x:2x2x1
jax: 0.10.0
libtpu: 0.0.40
codegen_flags: <defaults>
</compile_context>

<pallas_src>
import numpy as np
import jax
import jax.numpy as jnp
from jax.experimental import pallas as pl
from jax.experimental.pallas import tpu as pltpu

# ---- static config (mirrors MixedACTLayer.__init__ metadata, act_type='joint') ----
B = 8                        # batch
INPUTS_DIM = 32              # feature dim of x
NUM_AGENTS = 2
N_SBS = 2
MAX_USERS = 4
NUM_SPLITS = 4               # metadata['split_quantization']
A = NUM_SPLITS + 1           # real choices per discrete head (5)
AP = 8                       # lane-padded head width (8-aligned slices)
UE_COUNT = N_SBS * MAX_USERS // NUM_AGENTS   # = 4
N_DISC = UE_COUNT * N_SBS    # = 8 discrete heads -> action_limits[0] == 8
CONT_DIM = 4                 # Box action dim -> DiagGaussian head
DISC_W = N_DISC * AP         # 64 lanes of fused discrete logits
TOT_W = DISC_W + CONT_DIM    # 68 = fused head output width
OUT_W = 16                   # packed output: 8 disc + 4 cont + 1 logp + 3 pad
NEG_INF = -1e10              # mask value used by Categorical(x, available_actions)
BT = 8                       # batch tile (rows per grid step)


def mixed_act_kernel(x_ref, w_ref, b_ref, logstd_ref, ug_ref, eps_ref, out_ref):
    bt = x_ref.shape[0]
    x = x_ref[...]                                               # (bt, D) f32

    # ---- all 9 head linears fused into a single MXU matmul ----
    logits_all = jnp.dot(x, w_ref[...],
                         preferred_element_type=jnp.float32) + b_ref[...]     # (bt, 68)

    # ---- hoisted Gumbel transform for all 8 discrete heads at once ----
    g_all = -jnp.log(-jnp.log(ug_ref[...]))                      # (bt, 64)

    lane = jax.lax.broadcasted_iota(jnp.int32, (bt, AP), 1)      # 0..7 per head
    lane_f = lane.astype(jnp.float32)

    taken = [jnp.zeros((bt, 1), jnp.float32) for _ in range(UE_COUNT)]  # taken_splits
    act_cols = [None] * N_DISC
    logp_terms = [None] * N_DISC

    # 2 serial stages (n_sbs); the 4 UE heads inside one stage are data-independent,
    # so their VPU/XLU/EUP work can be overlapped by the scheduler.
    for s in range(N_SBS):
        for ue in range(UE_COUNT):
            idx = ue * N_SBS + s                                 # original head order
            off = idx * AP                                       # static, 8-aligned
            rem = NUM_SPLITS - taken[ue]                         # (bt, 1)
            mask = lane_f <= rem                                 # pad lanes 5..7 always False
            logits = jnp.where(mask, logits_all[:, off:off + AP], NEG_INF)

            m = jnp.max(logits, axis=-1, keepdims=True)
            lse = jnp.log(jnp.sum(jnp.exp(logits - m), axis=-1, keepdims=True))

            # categorical sample via Gumbel-max
            score = logits + g_all[:, off:off + AP]
            smax = jnp.max(score, axis=-1, keepdims=True)
            cand = jnp.where(score >= smax, lane, AP)
            action = jnp.min(cand, axis=-1, keepdims=True)       # (bt, 1) int32

            # log_prob(action) without materializing the full log-softmax tensor
            chosen = jnp.sum(jnp.where(lane == action, logits, 0.0),
                             axis=-1, keepdims=True)
            logp_terms[idx] = chosen - m - lse

            act_f = action.astype(jnp.float32)
            act_cols[idx] = act_f
            taken[ue] = taken[ue] + act_f                        # budget for next stage

    disc_logp = jnp.sum(jnp.concatenate(logp_terms, axis=-1), axis=-1, keepdims=True)

    # ---- DiagGaussian (Box) head ----
    mean = logits_all[:, DISC_W:DISC_W + CONT_DIM]               # (bt, 4)
    logstd = logstd_ref[...]                                     # (1, 4)
    std = jnp.exp(logstd)
    eps = eps_ref[...]                                           # (bt, 4) std normal
    cont_action = mean + std * eps
    cont_logp = jnp.sum(-0.5 * eps * eps - logstd - 0.5 * np.log(2.0 * np.pi),
                        axis=-1, keepdims=True)                  # (bt, 1)

    # ---- single lane-packed output store ----
    pad = jnp.zeros((bt, OUT_W - (N_DISC + CONT_DIM + 1)), jnp.float32)
    packed = jnp.concatenate(
        act_cols + [cont_action, disc_logp + cont_logp, pad], axis=-1)   # (bt, 16)
    out_ref[...] = packed


def mixed_act_forward(x, params, key):
    """Returns (actions (B, 12), action_log_probs (B, 1), available_actions=None)."""
    w_all, b_all, logstd = params
    batch = x.shape[0]
    assert batch % BT == 0, "batch must be a multiple of the batch tile"

    kg, kn = jax.random.split(key)
    u_g = jax.random.uniform(kg, (batch, DISC_W), jnp.float32,
                             minval=1e-7, maxval=1.0 - 1e-7)     # Gumbel-max uniforms
    eps = jax.random.normal(kn, (batch, CONT_DIM), jnp.float32)  # Gaussian head noise

    packed = pl.pallas_call(
        mixed_act_kernel,
        grid=(batch // BT,),
        in_specs=[
            pl.BlockSpec((BT, INPUTS_DIM), lambda i: (i, 0)),
            pl.BlockSpec((INPUTS_DIM, TOT_W), lambda i: (0, 0)),
            pl.BlockSpec((1, TOT_W), lambda i: (0, 0)),
            pl.BlockSpec((1, CONT_DIM), lambda i: (0, 0)),
            pl.BlockSpec((BT, DISC_W), lambda i: (i, 0)),
            pl.BlockSpec((BT, CONT_DIM), lambda i: (i, 0)),
        ],
        out_specs=pl.BlockSpec((BT, OUT_W), lambda i: (i, 0)),
        out_shape=jax.ShapeDtypeStruct((batch, OUT_W), jnp.float32),
        compiler_params=pltpu.CompilerParams(
            dimension_semantics=("parallel",)),
    )(x, w_all, b_all, logstd, u_g, eps)

    actions = packed[:, :N_DISC + CONT_DIM]
    action_log_probs = packed[:, N_DISC + CONT_DIM:N_DISC + CONT_DIM + 1]
    # matches torch return signature: (cat(actions,-1), action_log_probs, available_actions)
    return actions, action_log_probs, None


def init_params(key):
    """Deterministic synthetic init mirroring Categorical/DiagGaussian linear shapes,
    fused into one (D, 68) weight: 8 heads x 8 padded lanes + 4 mean columns."""
    ortho = jax.nn.initializers.orthogonal()
    keys = jax.random.split(key, N_DISC + 1)
    w_cols = []
    for i in range(N_DISC):
        w = 0.01 * ortho(keys[i], (INPUTS_DIM, A), jnp.float32)  # gain=0.01 Categorical
        w = jnp.pad(w, ((0, 0), (0, AP - A)))                    # zero-pad to 8 lanes
        w_cols.append(w)
    wm = ortho(keys[-1], (INPUTS_DIM, CONT_DIM), jnp.float32)    # DiagGaussian fc_mean
    w_all = jnp.concatenate(w_cols + [wm], axis=-1)              # (D, 68)
    b_all = jnp.zeros((1, TOT_W), jnp.float32)                   # zero biases
    logstd = jnp.zeros((1, CONT_DIM), jnp.float32)               # AddBias logstd zeros
    return w_all, b_all, logstd


if __name__ == "__main__":
    key = jax.random.PRNGKey(0)
    k_x, k_p, k_s = jax.random.split(key, 3)
    x = jax.random.normal(k_x, (B, INPUTS_DIM), jnp.float32)
    params = init_params(k_p)

    actions, action_log_probs, avail = mixed_act_forward(x, params, k_s)
    jax.block_until_ready((actions, action_log_probs))

    # sanity: discrete part respects the split budget per UE (mask semantics)
    disc = np.asarray(actions[:, :N_DISC])
    assert disc.min() >= 0 and disc.max() <= NUM_SPLITS
    per_ue = disc.reshape(B, UE_COUNT, N_SBS).sum(-1)
    assert np.all(per_ue <= NUM_SPLITS + 1e-6)
    assert actions.shape == (B, N_DISC + CONT_DIM)
    assert action_log_probs.shape == (B, 1)
    assert np.all(np.isfinite(np.asarray(action_log_probs)))
    assert avail is None
    print("KERNEL_OK")
</pallas_src>

<mosaic_0001>
module attributes {stable_mosaic.version = 11 : i64} {
  func.func @mixed_act_kernel(%arg0: i32, %arg1: memref<8x32xf32, #tpu.memory_space<vmem>>, %arg2: memref<32x68xf32, #tpu.memory_space<vmem>>, %arg3: memref<1x68xf32, #tpu.memory_space<vmem>>, %arg4: memref<1x4xf32, #tpu.memory_space<vmem>>, %arg5: memref<8x64xf32, #tpu.memory_space<vmem>>, %arg6: memref<8x4xf32, #tpu.memory_space<vmem>>, %arg7: memref<8x16xf32, #tpu.memory_space<vmem>>) attributes {dimension_semantics = [#tpu.dimension_semantics<parallel>], iteration_bounds = array<i64: 1>, scalar_prefetch = 0 : i64, scratch_operands = 0 : i64, tpu.core_type = #tpu.core_type<tc>, window_params = [{transform_indices = @transform_0, window_bounds = array<i64: 8, 32>}, {pipeline_mode = #tpu.pipeline_mode<synchronous>, transform_indices = @transform_1, window_bounds = array<i64: 32, 68>}, {pipeline_mode = #tpu.pipeline_mode<synchronous>, transform_indices = @transform_2, window_bounds = array<i64: 1, 68>}, {pipeline_mode = #tpu.pipeline_mode<synchronous>, transform_indices = @transform_3, window_bounds = array<i64: 1, 4>}, {transform_indices = @transform_4, window_bounds = array<i64: 8, 64>}, {transform_indices = @transform_5, window_bounds = array<i64: 8, 4>}, {transform_indices = @transform_6, window_bounds = array<i64: 8, 16>}]} {
    %c0 = arith.constant 0 : index
    %c0_0 = arith.constant 0 : index
    %0 = vector.load %arg1[%c0, %c0_0] : memref<8x32xf32, #tpu.memory_space<vmem>>, vector<8x32xf32>
    %c0_1 = arith.constant 0 : index
    %c0_2 = arith.constant 0 : index
    %1 = vector.load %arg2[%c0_1, %c0_2] : memref<32x68xf32, #tpu.memory_space<vmem>>, vector<32x68xf32>
    %cst = arith.constant dense<0.000000e+00> : vector<8x68xf32>
    %2 = tpu.matmul %0, %1, %cst {dimension_numbers = #tpu.dot_dimension_numbers<[1], [0], [0], [1], [0, 0, 1, 1], [], []>} : vector<8x32xf32>, vector<32x68xf32>, vector<8x68xf32> -> vector<8x68xf32>
    %c0_3 = arith.constant 0 : index
    %c0_4 = arith.constant 0 : index
    %3 = vector.load %arg3[%c0_3, %c0_4] : memref<1x68xf32, #tpu.memory_space<vmem>>, vector<1x68xf32>
    %4 = vector.broadcast %3 : vector<1x68xf32> to vector<8x68xf32>
    %5 = arith.addf %2, %4 : vector<8x68xf32>
    %c0_5 = arith.constant 0 : index
    %c0_6 = arith.constant 0 : index
    %6 = vector.load %arg5[%c0_5, %c0_6] : memref<8x64xf32, #tpu.memory_space<vmem>>, vector<8x64xf32>
    %7 = math.log %6 : vector<8x64xf32>
    %cst_7 = arith.constant 0.000000e+00 : f32
    %8 = vector.broadcast %cst_7 : f32 to vector<8x64xf32>
    %9 = arith.subf %8, %7 : vector<8x64xf32>
    %10 = math.log %9 : vector<8x64xf32>
    %cst_8 = arith.constant 0.000000e+00 : f32
    %11 = vector.broadcast %cst_8 : f32 to vector<8x64xf32>
    %12 = arith.subf %11, %10 : vector<8x64xf32>
    %13 = tpu.iota {dimensions = array<i32: 1>} : vector<8x8xi32>
    %14 = arith.sitofp %13 : vector<8x8xi32> to vector<8x8xf32>
    %cst_9 = arith.constant 0.000000e+00 : f32
    %15 = vector.broadcast %cst_9 : f32 to vector<8x1xf32>
    %cst_10 = arith.constant 0.000000e+00 : f32
    %16 = vector.broadcast %cst_10 : f32 to vector<8x1xf32>
    %cst_11 = arith.constant 0.000000e+00 : f32
    %17 = vector.broadcast %cst_11 : f32 to vector<8x1xf32>
    %cst_12 = arith.constant 0.000000e+00 : f32
    %18 = vector.broadcast %cst_12 : f32 to vector<8x1xf32>
    %cst_13 = arith.constant 4.000000e+00 : f32
    %19 = vector.broadcast %cst_13 : f32 to vector<8x1xf32>
    %20 = arith.subf %19, %15 : vector<8x1xf32>
    %21 = vector.broadcast %20 : vector<8x1xf32> to vector<8x8xf32>
    %22 = arith.cmpf ole, %14, %21 : vector<8x8xf32>
    %23 = vector.extract_strided_slice %5 {offsets = [0, 0], sizes = [8, 8], strides = [1, 1]} : vector<8x68xf32> to vector<8x8xf32>
    %cst_14 = arith.constant -1.000000e+10 : f32
    %24 = vector.broadcast %cst_14 : f32 to vector<8x8xf32>
    %25 = arith.select %22, %23, %24 : vector<8x8xi1>, vector<8x8xf32>
    %cst_15 = arith.constant dense<0xFF800000> : vector<8xf32>
    %26 = vector.multi_reduction <maximumf>, %25, %cst_15 [1] : vector<8x8xf32> to vector<8xf32>
    %27 = vector.shape_cast %26 : vector<8xf32> to vector<8x1xf32>
    %28 = vector.broadcast %27 : vector<8x1xf32> to vector<8x8xf32>
    %29 = arith.subf %25, %28 : vector<8x8xf32>
    %30 = math.exp %29 : vector<8x8xf32>
    %cst_16 = arith.constant dense<0.000000e+00> : vector<8xf32>
    %31 = vector.multi_reduction <add>, %30, %cst_16 [1] : vector<8x8xf32> to vector<8xf32>
    %32 = vector.shape_cast %31 : vector<8xf32> to vector<8x1xf32>
    %33 = math.log %32 : vector<8x1xf32>
    %34 = vector.extract_strided_slice %12 {offsets = [0, 0], sizes = [8, 8], strides = [1, 1]} : vector<8x64xf32> to vector<8x8xf32>
    %35 = arith.addf %25, %34 : vector<8x8xf32>
    %cst_17 = arith.constant dense<0xFF800000> : vector<8xf32>
    %36 = vector.multi_reduction <maximumf>, %35, %cst_17 [1] : vector<8x8xf32> to vector<8xf32>
    %37 = vector.shape_cast %36 : vector<8xf32> to vector<8x1xf32>
    %38 = vector.broadcast %37 : vector<8x1xf32> to vector<8x8xf32>
    %39 = arith.cmpf oge, %35, %38 : vector<8x8xf32>
    %c8_i32 = arith.constant 8 : i32
    %40 = vector.broadcast %c8_i32 : i32 to vector<8x8xi32>
    %41 = arith.select %39, %13, %40 : vector<8x8xi1>, vector<8x8xi32>
    %cst_18 = arith.constant dense<2147483647> : vector<8xi32>
    %42 = vector.multi_reduction <minsi>, %41, %cst_18 [1] : vector<8x8xi32> to vector<8xi32>
    %43 = vector.shape_cast %42 : vector<8xi32> to vector<8x1xi32>
    %44 = vector.broadcast %43 : vector<8x1xi32> to vector<8x8xi32>
    %45 = arith.cmpi eq, %13, %44 : vector<8x8xi32>
    %cst_19 = arith.constant 0.000000e+00 : f32
    %46 = vector.broadcast %cst_19 : f32 to vector<8x8xf32>
    %47 = arith.select %45, %25, %46 : vector<8x8xi1>, vector<8x8xf32>
    %cst_20 = arith.constant dense<0.000000e+00> : vector<8xf32>
    %48 = vector.multi_reduction <add>, %47, %cst_20 [1] : vector<8x8xf32> to vector<8xf32>
    %49 = vector.shape_cast %48 : vector<8xf32> to vector<8x1xf32>
    %50 = arith.subf %49, %27 : vector<8x1xf32>
    %51 = arith.subf %50, %33 : vector<8x1xf32>
    %52 = arith.sitofp %43 : vector<8x1xi32> to vector<8x1xf32>
    %53 = arith.addf %15, %52 : vector<8x1xf32>
    %cst_21 = arith.constant 4.000000e+00 : f32
    %54 = vector.broadcast %cst_21 : f32 to vector<8x1xf32>
    %55 = arith.subf %54, %16 : vector<8x1xf32>
    %56 = vector.broadcast %55 : vector<8x1xf32> to vector<8x8xf32>
    %57 = arith.cmpf ole, %14, %56 : vector<8x8xf32>
    %58 = vector.extract_strided_slice %5 {offsets = [0, 16], sizes = [8, 8], strides = [1, 1]} : vector<8x68xf32> to vector<8x8xf32>
    %cst_22 = arith.constant -1.000000e+10 : f32
    %59 = vector.broadcast %cst_22 : f32 to vector<8x8xf32>
    %60 = arith.select %57, %58, %59 : vector<8x8xi1>, vector<8x8xf32>
    %cst_23 = arith.constant dense<0xFF800000> : vector<8xf32>
    %61 = vector.multi_reduction <maximumf>, %60, %cst_23 [1] : vector<8x8xf32> to vector<8xf32>
    %62 = vector.shape_cast %61 : vector<8xf32> to vector<8x1xf32>
    %63 = vector.broadcast %62 : vector<8x1xf32> to vector<8x8xf32>
    %64 = arith.subf %60, %63 : vector<8x8xf32>
    %65 = math.exp %64 : vector<8x8xf32>
    %cst_24 = arith.constant dense<0.000000e+00> : vector<8xf32>
    %66 = vector.multi_reduction <add>, %65, %cst_24 [1] : vector<8x8xf32> to vector<8xf32>
    %67 = vector.shape_cast %66 : vector<8xf32> to vector<8x1xf32>
    %68 = math.log %67 : vector<8x1xf32>
    %69 = vector.extract_strided_slice %12 {offsets = [0, 16], sizes = [8, 8], strides = [1, 1]} : vector<8x64xf32> to vector<8x8xf32>
    %70 = arith.addf %60, %69 : vector<8x8xf32>
    %cst_25 = arith.constant dense<0xFF800000> : vector<8xf32>
    %71 = vector.multi_reduction <maximumf>, %70, %cst_25 [1] : vector<8x8xf32> to vector<8xf32>
    %72 = vector.shape_cast %71 : vector<8xf32> to vector<8x1xf32>
    %73 = vector.broadcast %72 : vector<8x1xf32> to vector<8x8xf32>
    %74 = arith.cmpf oge, %70, %73 : vector<8x8xf32>
    %c8_i32_26 = arith.constant 8 : i32
    %75 = vector.broadcast %c8_i32_26 : i32 to vector<8x8xi32>
    %76 = arith.select %74, %13, %75 : vector<8x8xi1>, vector<8x8xi32>
    %cst_27 = arith.constant dense<2147483647> : vector<8xi32>
    %77 = vector.multi_reduction <minsi>, %76, %cst_27 [1] : vector<8x8xi32> to vector<8xi32>
    %78 = vector.shape_cast %77 : vector<8xi32> to vector<8x1xi32>
    %79 = vector.broadcast %78 : vector<8x1xi32> to vector<8x8xi32>
    %80 = arith.cmpi eq, %13, %79 : vector<8x8xi32>
    %cst_28 = arith.constant 0.000000e+00 : f32
    %81 = vector.broadcast %cst_28 : f32 to vector<8x8xf32>
    %82 = arith.select %80, %60, %81 : vector<8x8xi1>, vector<8x8xf32>
    %cst_29 = arith.constant dense<0.000000e+00> : vector<8xf32>
    %83 = vector.multi_reduction <add>, %82, %cst_29 [1] : vector<8x8xf32> to vector<8xf32>
    %84 = vector.shape_cast %83 : vector<8xf32> to vector<8x1xf32>
    %85 = arith.subf %84, %62 : vector<8x1xf32>
    %86 = arith.subf %85, %68 : vector<8x1xf32>
    %87 = arith.sitofp %78 : vector<8x1xi32> to vector<8x1xf32>
    %88 = arith.addf %16, %87 : vector<8x1xf32>
    %cst_30 = arith.constant 4.000000e+00 : f32
    %89 = vector.broadcast %cst_30 : f32 to vector<8x1xf32>
    %90 = arith.subf %89, %17 : vector<8x1xf32>
    %91 = vector.broadcast %90 : vector<8x1xf32> to vector<8x8xf32>
    %92 = arith.cmpf ole, %14, %91 : vector<8x8xf32>
    %93 = vector.extract_strided_slice %5 {offsets = [0, 32], sizes = [8, 8], strides = [1, 1]} : vector<8x68xf32> to vector<8x8xf32>
    %cst_31 = arith.constant -1.000000e+10 : f32
    %94 = vector.broadcast %cst_31 : f32 to vector<8x8xf32>
    %95 = arith.select %92, %93, %94 : vector<8x8xi1>, vector<8x8xf32>
    %cst_32 = arith.constant dense<0xFF800000> : vector<8xf32>
    %96 = vector.multi_reduction <maximumf>, %95, %cst_32 [1] : vector<8x8xf32> to vector<8xf32>
    %97 = vector.shape_cast %96 : vector<8xf32> to vector<8x1xf32>
    %98 = vector.broadcast %97 : vector<8x1xf32> to vector<8x8xf32>
    %99 = arith.subf %95, %98 : vector<8x8xf32>
    %100 = math.exp %99 : vector<8x8xf32>
    %cst_33 = arith.constant dense<0.000000e+00> : vector<8xf32>
    %101 = vector.multi_reduction <add>, %100, %cst_33 [1] : vector<8x8xf32> to vector<8xf32>
    %102 = vector.shape_cast %101 : vector<8xf32> to vector<8x1xf32>
    %103 = math.log %102 : vector<8x1xf32>
    %104 = vector.extract_strided_slice %12 {offsets = [0, 32], sizes = [8, 8], strides = [1, 1]} : vector<8x64xf32> to vector<8x8xf32>
    %105 = arith.addf %95, %104 : vector<8x8xf32>
    %cst_34 = arith.constant dense<0xFF800000> : vector<8xf32>
    %106 = vector.multi_reduction <maximumf>, %105, %cst_34 [1] : vector<8x8xf32> to vector<8xf32>
    %107 = vector.shape_cast %106 : vector<8xf32> to vector<8x1xf32>
    %108 = vector.broadcast %107 : vector<8x1xf32> to vector<8x8xf32>
    %109 = arith.cmpf oge, %105, %108 : vector<8x8xf32>
    %c8_i32_35 = arith.constant 8 : i32
    %110 = vector.broadcast %c8_i32_35 : i32 to vector<8x8xi32>
    %111 = arith.select %109, %13, %110 : vector<8x8xi1>, vector<8x8xi32>
    %cst_36 = arith.constant dense<2147483647> : vector<8xi32>
    %112 = vector.multi_reduction <minsi>, %111, %cst_36 [1] : vector<8x8xi32> to vector<8xi32>
    %113 = vector.shape_cast %112 : vector<8xi32> to vector<8x1xi32>
    %114 = vector.broadcast %113 : vector<8x1xi32> to vector<8x8xi32>
    %115 = arith.cmpi eq, %13, %114 : vector<8x8xi32>
    %cst_37 = arith.constant 0.000000e+00 : f32
    %116 = vector.broadcast %cst_37 : f32 to vector<8x8xf32>
    %117 = arith.select %115, %95, %116 : vector<8x8xi1>, vector<8x8xf32>
    %cst_38 = arith.constant dense<0.000000e+00> : vector<8xf32>
    %118 = vector.multi_reduction <add>, %117, %cst_38 [1] : vector<8x8xf32> to vector<8xf32>
    %119 = vector.shape_cast %118 : vector<8xf32> to vector<8x1xf32>
    %120 = arith.subf %119, %97 : vector<8x1xf32>
    %121 = arith.subf %120, %103 : vector<8x1xf32>
    %122 = arith.sitofp %113 : vector<8x1xi32> to vector<8x1xf32>
    %123 = arith.addf %17, %122 : vector<8x1xf32>
    %cst_39 = arith.constant 4.000000e+00 : f32
    %124 = vector.broadcast %cst_39 : f32 to vector<8x1xf32>
    %125 = arith.subf %124, %18 : vector<8x1xf32>
    %126 = vector.broadcast %125 : vector<8x1xf32> to vector<8x8xf32>
    %127 = arith.cmpf ole, %14, %126 : vector<8x8xf32>
    %128 = vector.extract_strided_slice %5 {offsets = [0, 48], sizes = [8, 8], strides = [1, 1]} : vector<8x68xf32> to vector<8x8xf32>
    %cst_40 = arith.constant -1.000000e+10 : f32
    %129 = vector.broadcast %cst_40 : f32 to vector<8x8xf32>
    %130 = arith.select %127, %128, %129 : vector<8x8xi1>, vector<8x8xf32>
    %cst_41 = arith.constant dense<0xFF800000> : vector<8xf32>
    %131 = vector.multi_reduction <maximumf>, %130, %cst_41 [1] : vector<8x8xf32> to vector<8xf32>
    %132 = vector.shape_cast %131 : vector<8xf32> to vector<8x1xf32>
    %133 = vector.broadcast %132 : vector<8x1xf32> to vector<8x8xf32>
    %134 = arith.subf %130, %133 : vector<8x8xf32>
    %135 = math.exp %134 : vector<8x8xf32>
    %cst_42 = arith.constant dense<0.000000e+00> : vector<8xf32>
    %136 = vector.multi_reduction <add>, %135, %cst_42 [1] : vector<8x8xf32> to vector<8xf32>
    %137 = vector.shape_cast %136 : vector<8xf32> to vector<8x1xf32>
    %138 = math.log %137 : vector<8x1xf32>
    %139 = vector.extract_strided_slice %12 {offsets = [0, 48], sizes = [8, 8], strides = [1, 1]} : vector<8x64xf32> to vector<8x8xf32>
    %140 = arith.addf %130, %139 : vector<8x8xf32>
    %cst_43 = arith.constant dense<0xFF800000> : vector<8xf32>
    %141 = vector.multi_reduction <maximumf>, %140, %cst_43 [1] : vector<8x8xf32> to vector<8xf32>
    %142 = vector.shape_cast %141 : vector<8xf32> to vector<8x1xf32>
    %143 = vector.broadcast %142 : vector<8x1xf32> to vector<8x8xf32>
    %144 = arith.cmpf oge, %140, %143 : vector<8x8xf32>
    %c8_i32_44 = arith.constant 8 : i32
    %145 = vector.broadcast %c8_i32_44 : i32 to vector<8x8xi32>
    %146 = arith.select %144, %13, %145 : vector<8x8xi1>, vector<8x8xi32>
    %cst_45 = arith.constant dense<2147483647> : vector<8xi32>
    %147 = vector.multi_reduction <minsi>, %146, %cst_45 [1] : vector<8x8xi32> to vector<8xi32>
    %148 = vector.shape_cast %147 : vector<8xi32> to vector<8x1xi32>
    %149 = vector.broadcast %148 : vector<8x1xi32> to vector<8x8xi32>
    %150 = arith.cmpi eq, %13, %149 : vector<8x8xi32>
    %cst_46 = arith.constant 0.000000e+00 : f32
    %151 = vector.broadcast %cst_46 : f32 to vector<8x8xf32>
    %152 = arith.select %150, %130, %151 : vector<8x8xi1>, vector<8x8xf32>
    %cst_47 = arith.constant dense<0.000000e+00> : vector<8xf32>
    %153 = vector.multi_reduction <add>, %152, %cst_47 [1] : vector<8x8xf32> to vector<8xf32>
    %154 = vector.shape_cast %153 : vector<8xf32> to vector<8x1xf32>
    %155 = arith.subf %154, %132 : vector<8x1xf32>
    %156 = arith.subf %155, %138 : vector<8x1xf32>
    %157 = arith.sitofp %148 : vector<8x1xi32> to vector<8x1xf32>
    %158 = arith.addf %18, %157 : vector<8x1xf32>
    %cst_48 = arith.constant 4.000000e+00 : f32
    %159 = vector.broadcast %cst_48 : f32 to vector<8x1xf32>
    %160 = arith.subf %159, %53 : vector<8x1xf32>
    %161 = vector.broadcast %160 : vector<8x1xf32> to vector<8x8xf32>
    %162 = arith.cmpf ole, %14, %161 : vector<8x8xf32>
    %163 = vector.extract_strided_slice %5 {offsets = [0, 8], sizes = [8, 8], strides = [1, 1]} : vector<8x68xf32> to vector<8x8xf32>
    %cst_49 = arith.constant -1.000000e+10 : f32
    %164 = vector.broadcast %cst_49 : f32 to vector<8x8xf32>
    %165 = arith.select %162, %163, %164 : vector<8x8xi1>, vector<8x8xf32>
    %cst_50 = arith.constant dense<0xFF800000> : vector<8xf32>
    %166 = vector.multi_reduction <maximumf>, %165, %cst_50 [1] : vector<8x8xf32> to vector<8xf32>
    %167 = vector.shape_cast %166 : vector<8xf32> to vector<8x1xf32>
    %168 = vector.broadcast %167 : vector<8x1xf32> to vector<8x8xf32>
    %169 = arith.subf %165, %168 : vector<8x8xf32>
    %170 = math.exp %169 : vector<8x8xf32>
    %cst_51 = arith.constant dense<0.000000e+00> : vector<8xf32>
    %171 = vector.multi_reduction <add>, %170, %cst_51 [1] : vector<8x8xf32> to vector<8xf32>
    %172 = vector.shape_cast %171 : vector<8xf32> to vector<8x1xf32>
    %173 = math.log %172 : vector<8x1xf32>
    %174 = vector.extract_strided_slice %12 {offsets = [0, 8], sizes = [8, 8], strides = [1, 1]} : vector<8x64xf32> to vector<8x8xf32>
    %175 = arith.addf %165, %174 : vector<8x8xf32>
    %cst_52 = arith.constant dense<0xFF800000> : vector<8xf32>
    %176 = vector.multi_reduction <maximumf>, %175, %cst_52 [1] : vector<8x8xf32> to vector<8xf32>
    %177 = vector.shape_cast %176 : vector<8xf32> to vector<8x1xf32>
    %178 = vector.broadcast %177 : vector<8x1xf32> to vector<8x8xf32>
    %179 = arith.cmpf oge, %175, %178 : vector<8x8xf32>
    %c8_i32_53 = arith.constant 8 : i32
    %180 = vector.broadcast %c8_i32_53 : i32 to vector<8x8xi32>
    %181 = arith.select %179, %13, %180 : vector<8x8xi1>, vector<8x8xi32>
    %cst_54 = arith.constant dense<2147483647> : vector<8xi32>
    %182 = vector.multi_reduction <minsi>, %181, %cst_54 [1] : vector<8x8xi32> to vector<8xi32>
    %183 = vector.shape_cast %182 : vector<8xi32> to vector<8x1xi32>
    %184 = vector.broadcast %183 : vector<8x1xi32> to vector<8x8xi32>
    %185 = arith.cmpi eq, %13, %184 : vector<8x8xi32>
    %cst_55 = arith.constant 0.000000e+00 : f32
    %186 = vector.broadcast %cst_55 : f32 to vector<8x8xf32>
    %187 = arith.select %185, %165, %186 : vector<8x8xi1>, vector<8x8xf32>
    %cst_56 = arith.constant dense<0.000000e+00> : vector<8xf32>
    %188 = vector.multi_reduction <add>, %187, %cst_56 [1] : vector<8x8xf32> to vector<8xf32>
    %189 = vector.shape_cast %188 : vector<8xf32> to vector<8x1xf32>
    %190 = arith.subf %189, %167 : vector<8x1xf32>
    %191 = arith.subf %190, %173 : vector<8x1xf32>
    %192 = arith.sitofp %183 : vector<8x1xi32> to vector<8x1xf32>
    %cst_57 = arith.constant 4.000000e+00 : f32
    %193 = vector.broadcast %cst_57 : f32 to vector<8x1xf32>
    %194 = arith.subf %193, %88 : vector<8x1xf32>
    %195 = vector.broadcast %194 : vector<8x1xf32> to vector<8x8xf32>
    %196 = arith.cmpf ole, %14, %195 : vector<8x8xf32>
    %197 = vector.extract_strided_slice %5 {offsets = [0, 24], sizes = [8, 8], strides = [1, 1]} : vector<8x68xf32> to vector<8x8xf32>
    %cst_58 = arith.constant -1.000000e+10 : f32
    %198 = vector.broadcast %cst_58 : f32 to vector<8x8xf32>
    %199 = arith.select %196, %197, %198 : vector<8x8xi1>, vector<8x8xf32>
    %cst_59 = arith.constant dense<0xFF800000> : vector<8xf32>
    %200 = vector.multi_reduction <maximumf>, %199, %cst_59 [1] : vector<8x8xf32> to vector<8xf32>
    %201 = vector.shape_cast %200 : vector<8xf32> to vector<8x1xf32>
    %202 = vector.broadcast %201 : vector<8x1xf32> to vector<8x8xf32>
    %203 = arith.subf %199, %202 : vector<8x8xf32>
    %204 = math.exp %203 : vector<8x8xf32>
    %cst_60 = arith.constant dense<0.000000e+00> : vector<8xf32>
    %205 = vector.multi_reduction <add>, %204, %cst_60 [1] : vector<8x8xf32> to vector<8xf32>
    %206 = vector.shape_cast %205 : vector<8xf32> to vector<8x1xf32>
    %207 = math.log %206 : vector<8x1xf32>
    %208 = vector.extract_strided_slice %12 {offsets = [0, 24], sizes = [8, 8], strides = [1, 1]} : vector<8x64xf32> to vector<8x8xf32>
    %209 = arith.addf %199, %208 : vector<8x8xf32>
    %cst_61 = arith.constant dense<0xFF800000> : vector<8xf32>
    %210 = vector.multi_reduction <maximumf>, %209, %cst_61 [1] : vector<8x8xf32> to vector<8xf32>
    %211 = vector.shape_cast %210 : vector<8xf32> to vector<8x1xf32>
    %212 = vector.broadcast %211 : vector<8x1xf32> to vector<8x8xf32>
    %213 = arith.cmpf oge, %209, %212 : vector<8x8xf32>
    %c8_i32_62 = arith.constant 8 : i32
    %214 = vector.broadcast %c8_i32_62 : i32 to vector<8x8xi32>
    %215 = arith.select %213, %13, %214 : vector<8x8xi1>, vector<8x8xi32>
    %cst_63 = arith.constant dense<2147483647> : vector<8xi32>
    %216 = vector.multi_reduction <minsi>, %215, %cst_63 [1] : vector<8x8xi32> to vector<8xi32>
    %217 = vector.shape_cast %216 : vector<8xi32> to vector<8x1xi32>
    %218 = vector.broadcast %217 : vector<8x1xi32> to vector<8x8xi32>
    %219 = arith.cmpi eq, %13, %218 : vector<8x8xi32>
    %cst_64 = arith.constant 0.000000e+00 : f32
    %220 = vector.broadcast %cst_64 : f32 to vector<8x8xf32>
    %221 = arith.select %219, %199, %220 : vector<8x8xi1>, vector<8x8xf32>
    %cst_65 = arith.constant dense<0.000000e+00> : vector<8xf32>
    %222 = vector.multi_reduction <add>, %221, %cst_65 [1] : vector<8x8xf32> to vector<8xf32>
    %223 = vector.shape_cast %222 : vector<8xf32> to vector<8x1xf32>
    %224 = arith.subf %223, %201 : vector<8x1xf32>
    %225 = arith.subf %224, %207 : vector<8x1xf32>
    %226 = arith.sitofp %217 : vector<8x1xi32> to vector<8x1xf32>
    %cst_66 = arith.constant 4.000000e+00 : f32
    %227 = vector.broadcast %cst_66 : f32 to vector<8x1xf32>
    %228 = arith.subf %227, %123 : vector<8x1xf32>
    %229 = vector.broadcast %228 : vector<8x1xf32> to vector<8x8xf32>
    %230 = arith.cmpf ole, %14, %229 : vector<8x8xf32>
    %231 = vector.extract_strided_slice %5 {offsets = [0, 40], sizes = [8, 8], strides = [1, 1]} : vector<8x68xf32> to vector<8x8xf32>
    %cst_67 = arith.constant -1.000000e+10 : f32
    %232 = vector.broadcast %cst_67 : f32 to vector<8x8xf32>
    %233 = arith.select %230, %231, %232 : vector<8x8xi1>, vector<8x8xf32>
    %cst_68 = arith.constant dense<0xFF800000> : vector<8xf32>
    %234 = vector.multi_reduction <maximumf>, %233, %cst_68 [1] : vector<8x8xf32> to vector<8xf32>
    %235 = vector.shape_cast %234 : vector<8xf32> to vector<8x1xf32>
    %236 = vector.broadcast %235 : vector<8x1xf32> to vector<8x8xf32>
    %237 = arith.subf %233, %236 : vector<8x8xf32>
    %238 = math.exp %237 : vector<8x8xf32>
    %cst_69 = arith.constant dense<0.000000e+00> : vector<8xf32>
    %239 = vector.multi_reduction <add>, %238, %cst_69 [1] : vector<8x8xf32> to vector<8xf32>
    %240 = vector.shape_cast %239 : vector<8xf32> to vector<8x1xf32>
    %241 = math.log %240 : vector<8x1xf32>
    %242 = vector.extract_strided_slice %12 {offsets = [0, 40], sizes = [8, 8], strides = [1, 1]} : vector<8x64xf32> to vector<8x8xf32>
    %243 = arith.addf %233, %242 : vector<8x8xf32>
    %cst_70 = arith.constant dense<0xFF800000> : vector<8xf32>
    %244 = vector.multi_reduction <maximumf>, %243, %cst_70 [1] : vector<8x8xf32> to vector<8xf32>
    %245 = vector.shape_cast %244 : vector<8xf32> to vector<8x1xf32>
    %246 = vector.broadcast %245 : vector<8x1xf32> to vector<8x8xf32>
    %247 = arith.cmpf oge, %243, %246 : vector<8x8xf32>
    %c8_i32_71 = arith.constant 8 : i32
    %248 = vector.broadcast %c8_i32_71 : i32 to vector<8x8xi32>
    %249 = arith.select %247, %13, %248 : vector<8x8xi1>, vector<8x8xi32>
    %cst_72 = arith.constant dense<2147483647> : vector<8xi32>
    %250 = vector.multi_reduction <minsi>, %249, %cst_72 [1] : vector<8x8xi32> to vector<8xi32>
    %251 = vector.shape_cast %250 : vector<8xi32> to vector<8x1xi32>
    %252 = vector.broadcast %251 : vector<8x1xi32> to vector<8x8xi32>
    %253 = arith.cmpi eq, %13, %252 : vector<8x8xi32>
    %cst_73 = arith.constant 0.000000e+00 : f32
    %254 = vector.broadcast %cst_73 : f32 to vector<8x8xf32>
    %255 = arith.select %253, %233, %254 : vector<8x8xi1>, vector<8x8xf32>
    %cst_74 = arith.constant dense<0.000000e+00> : vector<8xf32>
    %256 = vector.multi_reduction <add>, %255, %cst_74 [1] : vector<8x8xf32> to vector<8xf32>
    %257 = vector.shape_cast %256 : vector<8xf32> to vector<8x1xf32>
    %258 = arith.subf %257, %235 : vector<8x1xf32>
    %259 = arith.subf %258, %241 : vector<8x1xf32>
    %260 = arith.sitofp %251 : vector<8x1xi32> to vector<8x1xf32>
    %cst_75 = arith.constant 4.000000e+00 : f32
    %261 = vector.broadcast %cst_75 : f32 to vector<8x1xf32>
    %262 = arith.subf %261, %158 : vector<8x1xf32>
    %263 = vector.broadcast %262 : vector<8x1xf32> to vector<8x8xf32>
    %264 = arith.cmpf ole, %14, %263 : vector<8x8xf32>
    %265 = vector.extract_strided_slice %5 {offsets = [0, 56], sizes = [8, 8], strides = [1, 1]} : vector<8x68xf32> to vector<8x8xf32>
    %cst_76 = arith.constant -1.000000e+10 : f32
    %266 = vector.broadcast %cst_76 : f32 to vector<8x8xf32>
    %267 = arith.select %264, %265, %266 : vector<8x8xi1>, vector<8x8xf32>
    %cst_77 = arith.constant dense<0xFF800000> : vector<8xf32>
    %268 = vector.multi_reduction <maximumf>, %267, %cst_77 [1] : vector<8x8xf32> to vector<8xf32>
    %269 = vector.shape_cast %268 : vector<8xf32> to vector<8x1xf32>
    %270 = vector.broadcast %269 : vector<8x1xf32> to vector<8x8xf32>
    %271 = arith.subf %267, %270 : vector<8x8xf32>
    %272 = math.exp %271 : vector<8x8xf32>
    %cst_78 = arith.constant dense<0.000000e+00> : vector<8xf32>
    %273 = vector.multi_reduction <add>, %272, %cst_78 [1] : vector<8x8xf32> to vector<8xf32>
    %274 = vector.shape_cast %273 : vector<8xf32> to vector<8x1xf32>
    %275 = math.log %274 : vector<8x1xf32>
    %276 = vector.extract_strided_slice %12 {offsets = [0, 56], sizes = [8, 8], strides = [1, 1]} : vector<8x64xf32> to vector<8x8xf32>
    %277 = arith.addf %267, %276 : vector<8x8xf32>
    %cst_79 = arith.constant dense<0xFF800000> : vector<8xf32>
    %278 = vector.multi_reduction <maximumf>, %277, %cst_79 [1] : vector<8x8xf32> to vector<8xf32>
    %279 = vector.shape_cast %278 : vector<8xf32> to vector<8x1xf32>
    %280 = vector.broadcast %279 : vector<8x1xf32> to vector<8x8xf32>
    %281 = arith.cmpf oge, %277, %280 : vector<8x8xf32>
    %c8_i32_80 = arith.constant 8 : i32
    %282 = vector.broadcast %c8_i32_80 : i32 to vector<8x8xi32>
    %283 = arith.select %281, %13, %282 : vector<8x8xi1>, vector<8x8xi32>
    %cst_81 = arith.constant dense<2147483647> : vector<8xi32>
    %284 = vector.multi_reduction <minsi>, %283, %cst_81 [1] : vector<8x8xi32> to vector<8xi32>
    %285 = vector.shape_cast %284 : vector<8xi32> to vector<8x1xi32>
    %286 = vector.broadcast %285 : vector<8x1xi32> to vector<8x8xi32>
    %287 = arith.cmpi eq, %13, %286 : vector<8x8xi32>
    %cst_82 = arith.constant 0.000000e+00 : f32
    %288 = vector.broadcast %cst_82 : f32 to vector<8x8xf32>
    %289 = arith.select %287, %267, %288 : vector<8x8xi1>, vector<8x8xf32>
    %cst_83 = arith.constant dense<0.000000e+00> : vector<8xf32>
    %290 = vector.multi_reduction <add>, %289, %cst_83 [1] : vector<8x8xf32> to vector<8xf32>
    %291 = vector.shape_cast %290 : vector<8xf32> to vector<8x1xf32>
    %292 = arith.subf %291, %269 : vector<8x1xf32>
    %293 = arith.subf %292, %275 : vector<8x1xf32>
    %294 = arith.sitofp %285 : vector<8x1xi32> to vector<8x1xf32>
    %295 = tpu.concatenate %51, %191, %86, %225, %121, %259, %156, %293 in 1 : vector<8x1xf32>, vector<8x1xf32>, vector<8x1xf32>, vector<8x1xf32>, vector<8x1xf32>, vector<8x1xf32>, vector<8x1xf32>, vector<8x1xf32> -> vector<8x8xf32>
    %cst_84 = arith.constant dense<0.000000e+00> : vector<8xf32>
    %296 = vector.multi_reduction <add>, %295, %cst_84 [1] : vector<8x8xf32> to vector<8xf32>
    %297 = vector.shape_cast %296 : vector<8xf32> to vector<8x1xf32>
    %298 = vector.extract_strided_slice %5 {offsets = [0, 64], sizes = [8, 4], strides = [1, 1]} : vector<8x68xf32> to vector<8x4xf32>
    %c0_85 = arith.constant 0 : index
    %c0_86 = arith.constant 0 : index
    %299 = vector.load %arg4[%c0_85, %c0_86] : memref<1x4xf32, #tpu.memory_space<vmem>>, vector<1x4xf32>
    %300 = math.exp %299 : vector<1x4xf32>
    %c0_87 = arith.constant 0 : index
    %c0_88 = arith.constant 0 : index
    %301 = vector.load %arg6[%c0_87, %c0_88] : memref<8x4xf32, #tpu.memory_space<vmem>>, vector<8x4xf32>
    %302 = vector.broadcast %300 : vector<1x4xf32> to vector<8x4xf32>
    %303 = arith.mulf %302, %301 : vector<8x4xf32>
    %304 = arith.addf %298, %303 : vector<8x4xf32>
    %cst_89 = arith.constant -5.000000e-01 : f32
    %305 = vector.broadcast %cst_89 : f32 to vector<8x4xf32>
    %306 = arith.mulf %305, %301 : vector<8x4xf32>
    %307 = arith.mulf %306, %301 : vector<8x4xf32>
    %308 = vector.broadcast %299 : vector<1x4xf32> to vector<8x4xf32>
    %309 = arith.subf %307, %308 : vector<8x4xf32>
    %cst_90 = arith.constant 0.918938517 : f32
    %310 = vector.broadcast %cst_90 : f32 to vector<8x4xf32>
    %311 = arith.subf %309, %310 : vector<8x4xf32>
    %cst_91 = arith.constant dense<0.000000e+00> : vector<8xf32>
    %312 = vector.multi_reduction <add>, %311, %cst_91 [1] : vector<8x4xf32> to vector<8xf32>
    %313 = vector.shape_cast %312 : vector<8xf32> to vector<8x1xf32>
    %cst_92 = arith.constant 0.000000e+00 : f32
    %314 = vector.broadcast %cst_92 : f32 to vector<8x3xf32>
    %315 = arith.addf %297, %313 : vector<8x1xf32>
    %316 = tpu.concatenate %52, %192, %87, %226, %122, %260, %157, %294, %304, %315, %314 in 1 : vector<8x1xf32>, vector<8x1xf32>, vector<8x1xf32>, vector<8x1xf32>, vector<8x1xf32>, vector<8x1xf32>, vector<8x1xf32>, vector<8x1xf32>, vector<8x4xf32>, vector<8x1xf32>, vector<8x3xf32> -> vector<8x16xf32>
    %c0_93 = arith.constant 0 : index
    %c0_94 = arith.constant 0 : index
    %317 = vector.load %arg7[%c0_93, %c0_94] : memref<8x16xf32, #tpu.memory_space<vmem>>, vector<8x16xf32>
    tpu.vector_store %arg7[%c0_93, %c0_94], %316 {strides = array<i32>} : memref<8x16xf32, #tpu.memory_space<vmem>>, vector<8x16xf32>,
    return
  }
  func.func @transform_0(%arg0: i32) -> (i32, i32) {
    %c0_i32 = arith.constant 0 : i32
    %c0_i32_0 = arith.constant 0 : i32
    return %arg0, %c0_i32 : i32, i32
  }
  func.func @transform_1(%arg0: i32) -> (i32, i32) {
    %c0_i32 = arith.constant 0 : i32
    %c0_i32_0 = arith.constant 0 : i32
    %c0_i32_1 = arith.constant 0 : i32
    return %c0_i32, %c0_i32_0 : i32, i32
  }
  func.func @transform_2(%arg0: i32) -> (i32, i32) {
    %c0_i32 = arith.constant 0 : i32
    %c0_i32_0 = arith.constant 0 : i32
    %c0_i32_1 = arith.constant 0 : i32
    return %c0_i32, %c0_i32_0 : i32, i32
  }
  func.func @transform_3(%arg0: i32) -> (i32, i32) {
    %c0_i32 = arith.constant 0 : i32
    %c0_i32_0 = arith.constant 0 : i32
    %c0_i32_1 = arith.constant 0 : i32
    return %c0_i32, %c0_i32_0 : i32, i32
  }
  func.func @transform_4(%arg0: i32) -> (i32, i32) {
    %c0_i32 = arith.constant 0 : i32
    %c0_i32_0 = arith.constant 0 : i32
    return %arg0, %c0_i32 : i32, i32
  }
  func.func @transform_5(%arg0: i32) -> (i32, i32) {
    %c0_i32 = arith.constant 0 : i32
    %c0_i32_0 = arith.constant 0 : i32
    return %arg0, %c0_i32 : i32, i32
  }
  func.func @transform_6(%arg0: i32) -> (i32, i32) {
    %c0_i32 = arith.constant 0 : i32
    %c0_i32_0 = arith.constant 0 : i32
    return %arg0, %c0_i32 : i32, i32
  }
}

</mosaic_0001>

<llo_original>
// kernel: tpu_custom_call.1
$region0: #{tpu_custom_call.1}
  #allocation0 [shape = 'u32[]', space=smem, size = 0x4, offset = 0x4, fixed_abs, tag = 'smem constant byte address 0x4 - core index']
  #allocation1 [shape = 'u32[144,128]{1,0:T(1,128)}', space=vmem, size = 0x12000, scoped, tag = 'internal scratch']
  %s0 = inlined_call_operand.vmem [shape: f32[8,32], index: 0, kind: input, shape index: {}]
  %s1 = inlined_call_operand.hbm [shape: f32[32,68], index: 1, kind: input, shape index: {}]
  %s2 = inlined_call_operand.vmem [shape: f32[1,68], index: 2, kind: input, shape index: {}]
  %s3 = inlined_call_operand.vmem [shape: f32[1,4], index: 3, kind: input, shape index: {}]
  %s4 = inlined_call_operand.vmem [shape: f32[8,64], index: 4, kind: input, shape index: {}]
  %s5 = inlined_call_operand.vmem [shape: f32[8,4], index: 5, kind: input, shape index: {}]
  %s6 = inlined_call_operand.hbm [shape: f32[8,16], index: 6, kind: output, shape index: {}]
  %s7 = sld [smem:[#allocation0]]
  $region38: #{tpu_custom_call.1} parent=0
    _
  %s9 = ssub.s32 1, %s7
  %s10 = scalar_select 0, %s9, %s7
  $region1: #{tpu_custom_call.1} parent=0
    #allocation2 [shape = 'u8[16384]{0}', space=vmem, size = 0x4000, scoped, tag = 'input window, operand 1, single buffered']
    #allocation3 [shape = 's32[1]{0}', space=sflag, size = 0x4, scoped, tag = 'scoped memory for tpu_custom_call.1']
    #allocation4 [shape = 's32[1]{0}', space=sflag, size = 0x4, scoped, tag = 'scoped memory for tpu_custom_call.1']
    #allocation5 [shape = 'u8[4096]{0}', space=vmem, size = 0x1000, scoped, tag = 'output window, operand 0, single buffered']
    %11 = vsyncpa [#allocation3], 0
    %12 = vsyncpa [#allocation4], 0
    // Predicated region
    $region2: #{tpu_custom_call.1} parent=1 // pred_check
      _
    $region3: #{tpu_custom_call.1} parent=1 // pred_check_branch
      %14 = sbr.rel (0) target = $region5
    $region4: #{tpu_custom_call.1} parent=1 // pred_region
      _
    $region5: #{tpu_custom_call.1} parent=1 // pred_fallthru
      _
    // Predicated region
    $region6: #{tpu_custom_call.1} parent=1 // pred_check
      _
    $region7: #{tpu_custom_call.1} parent=1 // pred_check_branch
      %16 = sbr.rel (0) target = $region9
    $region8: #{tpu_custom_call.1} parent=1 // pred_region
      %s18 = ssub.s32 512, 512
      %19 = vsyncadd [#allocation3], %s18
      %s20 = sshll.u32 [#allocation2], 4
      %s21 = int_to_ptr.vmem [resolvable:$true] %s20
      %26 = dma.hbm_to_vmem [thread:$0]  %s1, 512, %s21, [#allocation3], 128, 128, 8
    $region9: #{tpu_custom_call.1} parent=1 // pred_fallthru
      _
    // Predicated region
    $region10: #{tpu_custom_call.1} parent=1 // pred_check
      _
    $region11: #{tpu_custom_call.1} parent=1 // pred_check_branch
      %28 = sbr.rel (0) target = $region13
    $region12: #{tpu_custom_call.1} parent=1 // pred_region
      _
    $region13: #{tpu_custom_call.1} parent=1 // pred_fallthru
      _
    // Predicated region
    $region14: #{tpu_custom_call.1} parent=1 // pred_check
      _
    $region15: #{tpu_custom_call.1} parent=1 // pred_check_branch
      %30 = sbr.rel (0) target = $region17
    $region16: #{tpu_custom_call.1} parent=1 // pred_region
      _
    $region17: #{tpu_custom_call.1} parent=1 // pred_fallthru
      _
    // Predicated region
    $region18: #{tpu_custom_call.1} parent=1 // pred_check
      _
    $region19: #{tpu_custom_call.1} parent=1 // pred_check_branch
      %32 = sbr.rel (0) target = $region21
    $region20: #{tpu_custom_call.1} parent=1 // pred_region
      _
    $region21: #{tpu_custom_call.1} parent=1 // pred_fallthru
      _
    // Predicated region
    $region22: #{tpu_custom_call.1} parent=1 // pred_check
      _
    $region23: #{tpu_custom_call.1} parent=1 // pred_check_branch
      %34 = sbr.rel (0) target = $region25
    $region24: #{tpu_custom_call.1} parent=1 // pred_region
      _
    $region25: #{tpu_custom_call.1} parent=1 // pred_fallthru
      _
    // Predicated region
    $region26: #{tpu_custom_call.1} parent=1 // pred_check
      _
    $region27: #{tpu_custom_call.1} parent=1 // pred_check_branch
      %36 = sbr.rel (0) target = $region29
    $region28: #{tpu_custom_call.1} parent=1 // pred_region
      %37 = dma.done [#allocation3], 512
    $region29: #{tpu_custom_call.1} parent=1 // pred_fallthru
      _
    %v38 = vld [vmem:[%s0] sm:$0xff]
    %v39 = vld [vmem:[#allocation2] sm:$0xff]
    %v40 = vld [vmem:[#allocation2 + $0x8] sm:$0xff]
    %v41 = vld [vmem:[#allocation2 + $0x10] sm:$0xff]
    %v42 = vld [vmem:[#allocation2 + $0x18] sm:$0xff]
    %v43 = vld [vmem:[%s2] sm:$0x1]
    %v45 = vlaneseq
    %v46 = vshrl.u32 %v45, 7
    %v47 = vsub.s32 0, %v46
    %v48 = vrot.slane %v43, %v47
    %vm50 = vcmask 261120
    %v52 = vsel %vm50, %v38, 0
    %54 = vmatprep.subr.mxu0 0.0
    %55 = vmatpush1.msra.mxu0 %v39
    %56 = vmatprep.subr.mxu0 0.0
    %57 = vmatpush1.msra.mxu0 %v40
    %58 = vmatprep.subr.mxu0 0.0
    %59 = vmatpush1.msra.mxu0 %v41
    %60 = vmatprep.subr.mxu0 0.0
    %61 = vmatpush1.msra.mxu0 %v42
    %62 = vmatprep.subr.mxu0 0.0
    %63 = vmatpush1.msra.mxu0 0.0
    %64 = vmatprep.subr.mxu0 0.0
    %65 = vmatpush1.msra.mxu0 0.0
    %66 = vmatprep.subr.mxu0 0.0
    %67 = vmatpush1.msra.mxu0 0.0
    %68 = vmatprep.subr.mxu0 0.0
    %69 = vmatpush1.msra.mxu0 0.0
    %70 = vmatprep.subr.mxu0 0.0
    %71 = vmatpush1.msra.mxu0 0.0
    %72 = vmatprep.subr.mxu0 0.0
    %73 = vmatpush1.msra.mxu0 0.0
    %74 = vmatprep.subr.mxu0 0.0
    %75 = vmatpush1.msra.mxu0 0.0
    %76 = vmatprep.subr.mxu0 0.0
    %77 = vmatpush1.msra.mxu0 0.0
    %78 = vmatprep.subr.mxu0 0.0
    %79 = vmatpush1.msra.mxu0 0.0
    %80 = vmatprep.subr.mxu0 0.0
    %81 = vmatpush1.msra.mxu0 0.0
    %82 = vmatprep.subr.mxu0 0.0
    %83 = vmatpush1.msra.mxu0 0.0
    %84 = vmatprep.subr.mxu0 0.0
    %85 = vmatpush1.msra.mxu0 0.0
    %86 = vmatprep.subr.mxu0 0.0
    %87 = vmatpush1.msra.mxu0 0.0
    %88 = vmatprep.subr.mxu0 0.0
    %89 = vmatpush1.msra.mxu0 0.0
    %90 = vmatprep.subr.mxu0 0.0
    %91 = vmatpush1.msra.mxu0 0.0
    %92 = vmatprep.subr.mxu0 0.0
    %93 = vmatpush1.msra.mxu0 0.0
    %94 = vmatprep.subr.mxu0 0.0
    %95 = vmatpush1.msra.mxu0 0.0
    %96 = vmatprep.subr.mxu0 0.0
    %97 = vmatpush1.msra.mxu0 0.0
    %98 = vmatprep.subr.mxu0 0.0
    %99 = vmatpush1.msra.mxu0 0.0
    %100 = vmatprep.subr.mxu0 0.0
    %101 = vmatpush1.msra.mxu0 0.0
    %102 = vmatprep.subr.mxu0 0.0
    %103 = vmatpush1.msra.mxu0 0.0
    %104 = vmatprep.subr.mxu0 0.0
    %105 = vmatpush1.msra.mxu0 0.0
    %106 = vmatprep.subr.mxu0 0.0
    %107 = vmatpush1.msra.mxu0 0.0
    %108 = vmatprep.subr.mxu0 0.0
    %109 = vmatpush1.msra.mxu0 0.0
    %110 = vmatprep.subr.mxu0 0.0
    %111 = vmatpush1.msra.mxu0 0.0
    %112 = vmatprep.subr.mxu0 0.0
    %113 = vmatpush1.msra.mxu0 0.0
    %114 = vmatprep.subr.mxu0 0.0
    %115 = vmatpush1.msra.mxu0 0.0
    %116 = vmatprep.subr.mxu0 0.0
    %117 = vmatpush1.msra.mxu0 0.0
    %118 = vmatprep.mubr.f32.mxu0 0.0
    %119 = vmatmul.mubr.f32.gmra.mrb[0].mxu0 %v52
    %v120 = vpop.f32.mrb[0].mxu0
    %v121 = vadd.f32 %v48, %v120
    %v122 = vpop.f32.mrb[0].mxu0
    %123 = vdwg.mxu0
    %v124 = vld [vmem:[%s4] sm:$0xff]
    %v125 = vlog2.pop %v124
    %v126 = vmul.f32 %v125, 0.6931472
    %v127 = vsub.f32 0.0, %v126
    %v128 = vlog2.pop %v127
    %v129 = vmul.f32 %v128, 0.6931472
    %v130 = vsub.f32 0.0, %v129
    %v131 = vlaneseq
    %v132 = vand.u32 %v131, 127
    %v133 = vcvt.s32.f32 %v132
    %vm134 = vcmp.le.f32.partialorder %v133, 4.0
    %v135 = vsel %vm134, %v121, -1e+10
    %vm136 = vcmask 64512
    %v137 = vsel %vm136, %v135, -inf
    %138 = vmax.xlane.f32.xlu0 %v137
    %v139 = vpop.xlane.xlu0 %138
    %v140 = vsub.f32 %v135, %v139
    %v141 = vmul.f32 %v140, 1.442695
    %v142 = vpow.pop %v141
    %v143 = vsel %vm136, %v142, 0.0
    %144 = vadd.xlane.f32.xlu0 %v143
    %v145 = vpop.xlane.xlu0 %144
    %v146 = vlog2.pop %v145
    %v147 = vmul.f32 %v146, 0.6931472
    %v148 = vadd.f32 %v135, %v130
    %v149 = vsel %vm136, %v148, -inf
    %150 = vmax.xlane.f32.xlu0 %v149
    %v151 = vpop.xlane.xlu0 %150
    %vm152 = vcmp.ge.f32.partialorder %v148, %v151
    %v153 = vsel %vm152, %v132, 8
    %v154 = vsel %vm136, %v153, 2147483647
    %v155 = vand.u32 %v154, 65535
    %v156 = vshra.s32 %v154, 16
    %v157 = vcvt.s32.f32 %v155
    %v158 = vcvt.s32.f32 %v156
    %159 = vmin.xlane.f32.xlu0 %v158
    %v160 = vpop.xlane.xlu0 %159
    %vm161 = vcmp.eq.f32.partialorder %v158, %v160
    %v162 = vsel %vm161, %v157, inf
    %163 = vmin.xlane.f32.xlu0 %v162
    %v164 = vpop.xlane.xlu0 %163
    %v165 = vcvt.f32.s32 %v164
    %v166 = vcvt.f32.s32 %v160
    %v167 = vshll.u32 %v166, 16
    %v168 = vadd.s32 %v167, %v165
    %vm169 = vcmp.eq.s32.totalorder %v132, %v168
    %v170 = vsel %vm169, %v135, 0.0
    %v171 = vsel %vm136, %v170, 0.0
    %172 = vadd.xlane.f32.xlu0 %v171
    %v173 = vpop.xlane.xlu0 %172
    %v174 = vsub.f32 %v173, %v139
    %v175 = vsub.f32 %v174, %v147
    %v176 = vcvt.s32.f32 %v168
    %v177 = vadd.f32 %v176, 0.0
    %179 = vrot.lane.b32.xlu0 %v121, 112
    %v180 = vpop.permute.xlu0 %179
    %v182 = vsel %vm134, %v180, -1e+10
    %v183 = vsel %vm136, %v182, -inf
    %184 = vmax.xlane.f32.xlu0 %v183
    %v185 = vpop.xlane.xlu0 %184
    %v186 = vsub.f32 %v182, %v185
    %v187 = vmul.f32 %v186, 1.442695
    %v188 = vpow.pop %v187
    %v189 = vsel %vm136, %v188, 0.0
    %190 = vadd.xlane.f32.xlu0 %v189
    %v191 = vpop.xlane.xlu0 %190
    %v192 = vlog2.pop %v191
    %v193 = vmul.f32 %v192, 0.6931472
    %195 = vrot.lane.b32.xlu0 %v130, 112
    %v196 = vpop.permute.xlu0 %195
    %v198 = vadd.f32 %v182, %v196
    %v199 = vsel %vm136, %v198, -inf
    %200 = vmax.xlane.f32.xlu0 %v199
    %v201 = vpop.xlane.xlu0 %200
    %vm202 = vcmp.ge.f32.partialorder %v198, %v201
    %v203 = vsel %vm202, %v132, 8
    %v204 = vsel %vm136, %v203, 2147483647
    %v205 = vand.u32 %v204, 65535
    %v206 = vshra.s32 %v204, 16
    %v207 = vcvt.s32.f32 %v205
    %v208 = vcvt.s32.f32 %v206
    %209 = vmin.xlane.f32.xlu0 %v208
    %v210 = vpop.xlane.xlu0 %209
    %vm211 = vcmp.eq.f32.partialorder %v208, %v210
    %v212 = vsel %vm211, %v207, inf
    %213 = vmin.xlane.f32.xlu0 %v212
    %v214 = vpop.xlane.xlu0 %213
    %v215 = vcvt.f32.s32 %v214
    %v216 = vcvt.f32.s32 %v210
    %v217 = vshll.u32 %v216, 16
    %v218 = vadd.s32 %v217, %v215
    %vm219 = vcmp.eq.s32.totalorder %v132, %v218
    %v220 = vsel %vm219, %v182, 0.0
    %v221 = vsel %vm136, %v220, 0.0
    %222 = vadd.xlane.f32.xlu0 %v221
    %v223 = vpop.xlane.xlu0 %222
    %v224 = vsub.f32 %v223, %v185
    %v225 = vsub.f32 %v224, %v193
    %v226 = vcvt.s32.f32 %v218
    %v227 = vadd.f32 %v226, 0.0
    %228 = vrot.lane.b32.xlu0 %v121, 96
    %v229 = vpop.permute.xlu0 %228
    %v231 = vsel %vm134, %v229, -1e+10
    %v232 = vsel %vm136, %v231, -inf
    %233 = vmax.xlane.f32.xlu0 %v232
    %v234 = vpop.xlane.xlu0 %233
    %v235 = vsub.f32 %v231, %v234
    %v236 = vmul.f32 %v235, 1.442695
    %v237 = vpow.pop %v236
    %v238 = vsel %vm136, %v237, 0.0
    %239 = vadd.xlane.f32.xlu0 %v238
    %v240 = vpop.xlane.xlu0 %239
    %v241 = vlog2.pop %v240
    %v242 = vmul.f32 %v241, 0.6931472
    %243 = vrot.lane.b32.xlu0 %v130, 96
    %v244 = vpop.permute.xlu0 %243
    %v246 = vadd.f32 %v231, %v244
    %v247 = vsel %vm136, %v246, -inf
    %248 = vmax.xlane.f32.xlu0 %v247
    %v249 = vpop.xlane.xlu0 %248
    %vm250 = vcmp.ge.f32.partialorder %v246, %v249
    %v251 = vsel %vm250, %v132, 8
    %v252 = vsel %vm136, %v251, 2147483647
    %v253 = vand.u32 %v252, 65535
    %v254 = vshra.s32 %v252, 16
    %v255 = vcvt.s32.f32 %v253
    %v256 = vcvt.s32.f32 %v254
    %257 = vmin.xlane.f32.xlu0 %v256
    %v258 = vpop.xlane.xlu0 %257
    %vm259 = vcmp.eq.f32.partialorder %v256, %v258
    %v260 = vsel %vm259, %v255, inf
    %261 = vmin.xlane.f32.xlu0 %v260
    %v262 = vpop.xlane.xlu0 %261
    %v263 = vcvt.f32.s32 %v262
    %v264 = vcvt.f32.s32 %v258
    %v265 = vshll.u32 %v264, 16
    %v266 = vadd.s32 %v265, %v263
    %vm267 = vcmp.eq.s32.totalorder %v132, %v266
    %v268 = vsel %vm267, %v231, 0.0
    %v269 = vsel %vm136, %v268, 0.0
    %270 = vadd.xlane.f32.xlu0 %v269
    %v271 = vpop.xlane.xlu0 %270
    %v272 = vsub.f32 %v271, %v234
    %v273 = vsub.f32 %v272, %v242
    %v274 = vcvt.s32.f32 %v266
    %v275 = vadd.f32 %v274, 0.0
    %276 = vrot.lane.b32.xlu0 %v121, 80
    %v277 = vpop.permute.xlu0 %276
    %v279 = vsel %vm134, %v277, -1e+10
    %v280 = vsel %vm136, %v279, -inf
    %281 = vmax.xlane.f32.xlu0 %v280
    %v282 = vpop.xlane.xlu0 %281
    %v283 = vsub.f32 %v279, %v282
    %v284 = vmul.f32 %v283, 1.442695
    %v285 = vpow.pop %v284
    %v286 = vsel %vm136, %v285, 0.0
    %287 = vadd.xlane.f32.xlu0 %v286
    %v288 = vpop.xlane.xlu0 %287
    %v289 = vlog2.pop %v288
    %v290 = vmul.f32 %v289, 0.6931472
    %291 = vrot.lane.b32.xlu0 %v130, 80
    %v292 = vpop.permute.xlu0 %291
    %v294 = vadd.f32 %v279, %v292
    %v295 = vsel %vm136, %v294, -inf
    %296 = vmax.xlane.f32.xlu0 %v295
    %v297 = vpop.xlane.xlu0 %296
    %vm298 = vcmp.ge.f32.partialorder %v294, %v297
    %v299 = vsel %vm298, %v132, 8
    %v300 = vsel %vm136, %v299, 2147483647
    %v301 = vand.u32 %v300, 65535
    %v302 = vshra.s32 %v300, 16
    %v303 = vcvt.s32.f32 %v301
    %v304 = vcvt.s32.f32 %v302
    %305 = vmin.xlane.f32.xlu0 %v304
    %v306 = vpop.xlane.xlu0 %305
    %vm307 = vcmp.eq.f32.partialorder %v304, %v306
    %v308 = vsel %vm307, %v303, inf
    %309 = vmin.xlane.f32.xlu0 %v308
    %v310 = vpop.xlane.xlu0 %309
    %v311 = vcvt.f32.s32 %v310
    %v312 = vcvt.f32.s32 %v306
    %v313 = vshll.u32 %v312, 16
    %v314 = vadd.s32 %v313, %v311
    %vm315 = vcmp.eq.s32.totalorder %v132, %v314
    %v316 = vsel %vm315, %v279, 0.0
    %v317 = vsel %vm136, %v316, 0.0
    %318 = vadd.xlane.f32.xlu0 %v317
    %v319 = vpop.xlane.xlu0 %318
    %v320 = vsub.f32 %v319, %v282
    %v321 = vsub.f32 %v320, %v290
    %v322 = vcvt.s32.f32 %v314
    %v323 = vadd.f32 %v322, 0.0
    %v324 = vsub.f32 4.0, %v177
    %vm325 = vcmp.le.f32.partialorder %v133, %v324
    %326 = vrot.lane.b32.xlu0 %v121, 120
    %v327 = vpop.permute.xlu0 %326
    %v329 = vsel %vm325, %v327, -1e+10
    %v330 = vsel %vm136, %v329, -inf
    %331 = vmax.xlane.f32.xlu0 %v330
    %v332 = vpop.xlane.xlu0 %331
    %v333 = vsub.f32 %v329, %v332
    %v334 = vmul.f32 %v333, 1.442695
    %v335 = vpow.pop %v334
    %v336 = vsel %vm136, %v335, 0.0
    %337 = vadd.xlane.f32.xlu0 %v336
    %v338 = vpop.xlane.xlu0 %337
    %v339 = vlog2.pop %v338
    %v340 = vmul.f32 %v339, 0.6931472
    %341 = vrot.lane.b32.xlu0 %v130, 120
    %v342 = vpop.permute.xlu0 %341
    %v344 = vadd.f32 %v329, %v342
    %v345 = vsel %vm136, %v344, -inf
    %346 = vmax.xlane.f32.xlu0 %v345
    %v347 = vpop.xlane.xlu0 %346
    %vm348 = vcmp.ge.f32.partialorder %v344, %v347
    %v349 = vsel %vm348, %v132, 8
    %v350 = vsel %vm136, %v349, 2147483647
    %v351 = vand.u32 %v350, 65535
    %v352 = vshra.s32 %v350, 16
    %v353 = vcvt.s32.f32 %v351
    %v354 = vcvt.s32.f32 %v352
    %355 = vmin.xlane.f32.xlu0 %v354
    %v356 = vpop.xlane.xlu0 %355
    %vm357 = vcmp.eq.f32.partialorder %v354, %v356
    %v358 = vsel %vm357, %v353, inf
    %359 = vmin.xlane.f32.xlu0 %v358
    %v360 = vpop.xlane.xlu0 %359
    %v361 = vcvt.f32.s32 %v360
    %v362 = vcvt.f32.s32 %v356
    %v363 = vshll.u32 %v362, 16
    %v364 = vadd.s32 %v363, %v361
    %vm365 = vcmp.eq.s32.totalorder %v132, %v364
    %v366 = vsel %vm365, %v329, 0.0
    %v367 = vsel %vm136, %v366, 0.0
    %368 = vadd.xlane.f32.xlu0 %v367
    %v369 = vpop.xlane.xlu0 %368
    %v370 = vsub.f32 %v369, %v332
    %v371 = vsub.f32 %v370, %v340
    %v372 = vcvt.s32.f32 %v364
    %v373 = vsub.f32 4.0, %v227
    %vm374 = vcmp.le.f32.partialorder %v133, %v373
    %375 = vrot.lane.b32.xlu0 %v121, 104
    %v376 = vpop.permute.xlu0 %375
    %v378 = vsel %vm374, %v376, -1e+10
    %v379 = vsel %vm136, %v378, -inf
    %380 = vmax.xlane.f32.xlu0 %v379
    %v381 = vpop.xlane.xlu0 %380
    %v382 = vsub.f32 %v378, %v381
    %v383 = vmul.f32 %v382, 1.442695
    %v384 = vpow.pop %v383
    %v385 = vsel %vm136, %v384, 0.0
    %386 = vadd.xlane.f32.xlu0 %v385
    %v387 = vpop.xlane.xlu0 %386
    %v388 = vlog2.pop %v387
    %v389 = vmul.f32 %v388, 0.6931472
    %390 = vrot.lane.b32.xlu0 %v130, 104
    %v391 = vpop.permute.xlu0 %390
    %v393 = vadd.f32 %v378, %v391
    %v394 = vsel %vm136, %v393, -inf
    %395 = vmax.xlane.f32.xlu0 %v394
    %v396 = vpop.xlane.xlu0 %395
    %vm397 = vcmp.ge.f32.partialorder %v393, %v396
    %v398 = vsel %vm397, %v132, 8
    %v399 = vsel %vm136, %v398, 2147483647
    %v400 = vand.u32 %v399, 65535
    %v401 = vshra.s32 %v399, 16
    %v402 = vcvt.s32.f32 %v400
    %v403 = vcvt.s32.f32 %v401
    %404 = vmin.xlane.f32.xlu0 %v403
    %v405 = vpop.xlane.xlu0 %404
    %vm406 = vcmp.eq.f32.partialorder %v403, %v405
    %v407 = vsel %vm406, %v402, inf
    %408 = vmin.xlane.f32.xlu0 %v407
    %v409 = vpop.xlane.xlu0 %408
    %v410 = vcvt.f32.s32 %v409
    %v411 = vcvt.f32.s32 %v405
    %v412 = vshll.u32 %v411, 16
    %v413 = vadd.s32 %v412, %v410
    %vm414 = vcmp.eq.s32.totalorder %v132, %v413
    %v415 = vsel %vm414, %v378, 0.0
    %v416 = vsel %vm136, %v415, 0.0
    %417 = vadd.xlane.f32.xlu0 %v416
    %v418 = vpop.xlane.xlu0 %417
    %v419 = vsub.f32 %v418, %v381
    %v420 = vsub.f32 %v419, %v389
    %v421 = vcvt.s32.f32 %v413
    %v422 = vsub.f32 4.0, %v275
    %vm423 = vcmp.le.f32.partialorder %v133, %v422
    %424 = vrot.lane.b32.xlu0 %v121, 88
    %v425 = vpop.permute.xlu0 %424
    %v427 = vsel %vm423, %v425, -1e+10
    %v428 = vsel %vm136, %v427, -inf
    %429 = vmax.xlane.f32.xlu0 %v428
    %v430 = vpop.xlane.xlu0 %429
    %v431 = vsub.f32 %v427, %v430
    %v432 = vmul.f32 %v431, 1.442695
    %v433 = vpow.pop %v432
    %v434 = vsel %vm136, %v433, 0.0
    %435 = vadd.xlane.f32.xlu0 %v434
    %v436 = vpop.xlane.xlu0 %435
    %v437 = vlog2.pop %v436
    %v438 = vmul.f32 %v437, 0.6931472
    %439 = vrot.lane.b32.xlu0 %v130, 88
    %v440 = vpop.permute.xlu0 %439
    %v442 = vadd.f32 %v427, %v440
    %v443 = vsel %vm136, %v442, -inf
    %444 = vmax.xlane.f32.xlu0 %v443
    %v445 = vpop.xlane.xlu0 %444
    %vm446 = vcmp.ge.f32.partialorder %v442, %v445
    %v447 = vsel %vm446, %v132, 8
    %v448 = vsel %vm136, %v447, 2147483647
    %v449 = vand.u32 %v448, 65535
    %v450 = vshra.s32 %v448, 16
    %v451 = vcvt.s32.f32 %v449
    %v452 = vcvt.s32.f32 %v450
    %453 = vmin.xlane.f32.xlu0 %v452
    %v454 = vpop.xlane.xlu0 %453
    %vm455 = vcmp.eq.f32.partialorder %v452, %v454
    %v456 = vsel %vm455, %v451, inf
    %457 = vmin.xlane.f32.xlu0 %v456
    %v458 = vpop.xlane.xlu0 %457
    %v459 = vcvt.f32.s32 %v458
    %v460 = vcvt.f32.s32 %v454
    %v461 = vshll.u32 %v460, 16
    %v462 = vadd.s32 %v461, %v459
    %vm463 = vcmp.eq.s32.totalorder %v132, %v462
    %v464 = vsel %vm463, %v427, 0.0
    %v465 = vsel %vm136, %v464, 0.0
    %466 = vadd.xlane.f32.xlu0 %v465
    %v467 = vpop.xlane.xlu0 %466
    %v468 = vsub.f32 %v467, %v430
    %v469 = vsub.f32 %v468, %v438
    %v470 = vcvt.s32.f32 %v462
    %v471 = vsub.f32 4.0, %v323
    %vm472 = vcmp.le.f32.partialorder %v133, %v471
    %473 = vrot.lane.b32.xlu0 %v121, 72
    %v474 = vpop.permute.xlu0 %473
    %v476 = vsel %vm472, %v474, -1e+10
    %v477 = vsel %vm136, %v476, -inf
    %478 = vmax.xlane.f32.xlu0 %v477
    %v479 = vpop.xlane.xlu0 %478
    %v480 = vsub.f32 %v476, %v479
    %v481 = vmul.f32 %v480, 1.442695
    %v482 = vpow.pop %v481
    %v483 = vsel %vm136, %v482, 0.0
    %484 = vadd.xlane.f32.xlu0 %v483
    %v485 = vpop.xlane.xlu0 %484
    %v486 = vlog2.pop %v485
    %v487 = vmul.f32 %v486, 0.6931472
    %488 = vrot.lane.b32.xlu0 %v130, 72
    %v489 = vpop.permute.xlu0 %488
    %v491 = vadd.f32 %v476, %v489
    %v492 = vsel %vm136, %v491, -inf
    %493 = vmax.xlane.f32.xlu0 %v492
    %v494 = vpop.xlane.xlu0 %493
    %vm495 = vcmp.ge.f32.partialorder %v491, %v494
    %v496 = vsel %vm495, %v132, 8
    %v497 = vsel %vm136, %v496, 2147483647
    %v498 = vand.u32 %v497, 65535
    %v499 = vshra.s32 %v497, 16
    %v500 = vcvt.s32.f32 %v498
    %v501 = vcvt.s32.f32 %v499
    %502 = vmin.xlane.f32.xlu0 %v501
    %v503 = vpop.xlane.xlu0 %502
    %vm504 = vcmp.eq.f32.partialorder %v501, %v503
    %v505 = vsel %vm504, %v500, inf
    %506 = vmin.xlane.f32.xlu0 %v505
    %v507 = vpop.xlane.xlu0 %506
    %v508 = vcvt.f32.s32 %v507
    %v509 = vcvt.f32.s32 %v503
    %v510 = vshll.u32 %v509, 16
    %v511 = vadd.s32 %v510, %v508
    %vm512 = vcmp.eq.s32.totalorder %v132, %v511
    %v513 = vsel %vm512, %v476, 0.0
    %v514 = vsel %vm136, %v513, 0.0
    %515 = vadd.xlane.f32.xlu0 %v514
    %v516 = vpop.xlane.xlu0 %515
    %v517 = vsub.f32 %v516, %v479
    %v518 = vsub.f32 %v517, %v487
    %v519 = vcvt.s32.f32 %v511
    %vm520 = vcmask 7168
    %v521 = vsel %vm520, %v175, %v371
    %vm522 = vcmask 15360
    %v523 = vsel %vm522, %v521, %v225
    %vm524 = vcmask 23552
    %v525 = vsel %vm524, %v523, %v420
    %vm526 = vcmask 31744
    %v527 = vsel %vm526, %v525, %v273
    %vm528 = vcmask 39936
    %v529 = vsel %vm528, %v527, %v469
    %vm530 = vcmask 48128
    %v531 = vsel %vm530, %v529, %v321
    %vm532 = vcmask 56320
    %v533 = vsel %vm532, %v531, %v518
    %v534 = vsel %vm136, %v533, 0.0
    %535 = vadd.xlane.f32.xlu0 %v534
    %v536 = vpop.xlane.xlu0 %535
    %v537 = vld [vmem:[%s3] sm:$0x1]
    %v538 = vmul.f32 %v537, 1.442695
    %v539 = vpow.pop %v538
    %v540 = vld [vmem:[%s5] sm:$0xff]
    %v542 = vlaneseq
    %v543 = vshrl.u32 %v542, 7
    %v544 = vsub.s32 0, %v543
    %v545 = vrot.slane %v539, %v544
    %v547 = vmul.f32 %v545, %v540
    %549 = vrot.lane.b32.xlu0 %v547, 64
    %v550 = vpop.permute.xlu0 %549
    %v552 = vadd.f32 %v121, %v550
    %v553 = vmul.f32 %v540, -0.5
    %v554 = vmul.f32 %v553, %v540
    %v556 = vlaneseq
    %v557 = vshrl.u32 %v556, 7
    %v558 = vsub.s32 0, %v557
    %v559 = vrot.slane %v537, %v558
    %v561 = vsub.f32 %v554, %v559
    %v562 = vsub.f32 %v561, 0.9189385
    %v563 = vsel %vm526, %v562, 0.0
    %564 = vadd.xlane.f32.xlu0 %v563
    %v565 = vpop.xlane.xlu0 %564
    %v566 = vadd.f32 %v536, %v565
    %568 = vrot.lane.b32.xlu0 %v552, 72
    %v569 = vpop.permute.xlu0 %568
    %v571 = vsel %vm520, %v176, %v372
    %v572 = vsel %vm522, %v571, %v226
    %v573 = vsel %vm524, %v572, %v421
    %v574 = vsel %vm526, %v573, %v274
    %v575 = vsel %vm528, %v574, %v470
    %v576 = vsel %vm530, %v575, %v322
    %v577 = vsel %vm532, %v576, %v519
    %v578 = vsel %vm136, %v577, %v569
    %vm579 = vcmask 97280
    %v580 = vsel %vm579, %v578, %v566
    %vm581 = vcmask 105472
    %v582 = vsel %vm581, %v580, 0.0
    %vm583 = vcmask 130048
    %584 = vst.msk [vmem:[#allocation5] sm:$0xff] %vm583, %v582
    // Predicated region
    $region30: #{tpu_custom_call.1} parent=1 // pred_check
      _
    $region31: #{tpu_custom_call.1} parent=1 // pred_check_branch
      %586 = sbr.rel (0) target = $region33
    $region32: #{tpu_custom_call.1} parent=1 // pred_region
      %s588 = ssub.s32 128, 128
      %589 = vsyncadd [#allocation4], %s588
      %s591 = sshll.u32 [#allocation5], 4
      %s592 = int_to_ptr.vmem [resolvable:$true] %s591
      %594 = dma.vmem_to_hbm [thread:$0]  %s592, 128, %s6, [#allocation4]
    $region33: #{tpu_custom_call.1} parent=1 // pred_fallthru
      _
    // Predicated region
    $region34: #{tpu_custom_call.1} parent=1 // pred_check
      _
    $region35: #{tpu_custom_call.1} parent=1 // pred_check_branch
      %596 = sbr.rel (0) target = $region37
    $region36: #{tpu_custom_call.1} parent=1 // pred_region
      %597 = dma.done [#allocation4], 128
    $region37: #{tpu_custom_call.1} parent=1 // pred_fallthru
      _
    %598 = vsyncpa [#allocation3], 1
    %599 = vsyncpa [#allocation4], 1

</llo_original>
